<compile_context>
chip_gen: v7x
topology: tpu7x:2x2x1
jax: 0.10.0
libtpu: 0.0.40
codegen_flags: <defaults>
</compile_context>

<pallas_src>
import numpy as np
import jax
import jax.numpy as jnp
from jax.experimental import pallas as pl
from jax.experimental.pallas import tpu as pltpu


def _round_up(x, m):
    return ((x + m - 1) // m) * m


def _build_constants(n):
    """Batch-independent structure of the (4n, 4n) payoff matrix, flattened.

    P[b] (flattened row-major, k = i*4n + j) is
        P_flat[b, k] = cr[b, k] * cc[b, k] * (initial[b]*Ka[k] + traise[b]*Kb[k])
    with cr[b, k] = c_f / (1 - c_f), cc[b, k] = c_g, where f / g are the card
    indices addressed by row i and column j.  Returns float32 numpy arrays
    SelR (n, F), SelC (n, F) (one-hot gathers) and KAB (2, F) = [Ka+Kb ; Kb].
    """
    two_n, four_n = 2 * n, 4 * n
    F = four_n * four_n

    idx = np.arange(four_n)
    card = (idx % two_n) // 2                      # card index addressed by a row/col
    even = (idx % 2) == 0
    low = idx < two_n

    FR, GC = card[:, None], card[None, :]
    cmp = np.sign(GC - FR).astype(np.float64)      # +1 above diag, -1 below, 0 diag
    notdiag = (FR != GC).astype(np.float64)

    r_even, c_even = even[:, None], even[None, :]
    r_low, c_low = low[:, None], low[None, :]

    # The five strided scatter regions of the reference forward pass.
    A = r_low & r_even & c_low & c_even             # cmp * pm * initial
    B = (~r_low) & r_even & c_low & (~c_even)       #       pm * initial
    C = r_low & (~r_even) & (~c_low) & c_even       #      -pm * initial
    D = (~r_low) & (~r_even) & c_low & (~c_even)    # cmp * pm * traise
    E = r_low & (~r_even) & (~c_low) & (~c_even)    # cmp * pm * traise

    Ka = (np.where(A, cmp, 0.0) + np.where(B, notdiag, 0.0)
          + np.where(C, -notdiag, 0.0))
    Kb = np.where(D, cmp, 0.0) + np.where(E, cmp, 0.0)
    KAB = np.stack([(Ka + Kb).reshape(F), Kb.reshape(F)], axis=0).astype(np.float32)

    k = np.arange(F)
    row_card = card[k // four_n]
    col_card = card[k % four_n]
    cards = np.arange(n)[:, None]
    SelR = (row_card[None, :] == cards).astype(np.float32)   # (n, F)
    SelC = (col_card[None, :] == cards).astype(np.float32)   # (n, F)
    return SelR, SelC, KAB


def _one_card_poker_kernel(param_ref, selr_ref, selc_ref, kab_ref, out_ref):
    # param block: (Bt, 2 + n); constants: SelR/SelC (n, F), KAB (2, F).
    carddist = param_ref[:, 2:]                      # (Bt, n)
    # Divide only on the tiny (Bt, n) block — never on the full output tile.
    cratio = carddist / (1.0 - carddist)             # c / (1 - c)

    # One-hot gathers (dilate card axis into the flattened 4n x 4n layout) and
    # the affine weight [initial, raiseval] @ [Ka+Kb ; Kb] on the idle MXU.
    cr = jnp.dot(cratio, selr_ref[...], preferred_element_type=jnp.float32)    # (Bt, F)
    cc = jnp.dot(carddist, selc_ref[...], preferred_element_type=jnp.float32)  # (Bt, F)
    w = jnp.dot(param_ref[:, 0:2], kab_ref[...], preferred_element_type=jnp.float32)

    # 2 VPU multiplies per output element; lane-dense store.
    out_ref[...] = cr * cc * w


def one_card_poker_wnhd(param, n_cards, block_b=None):
    """param: (B, 2 + n_cards) -> P: (B, 4*n_cards, 4*n_cards), float32."""
    B, feat = param.shape
    assert feat == 2 + n_cards
    four_n = 4 * n_cards
    F = four_n * four_n

    SelR, SelC, KAB = _build_constants(n_cards)

    # Batch blocking: amortize per-grid-step overhead over Bt rows (sublanes).
    Bt = block_b if block_b is not None else min(_round_up(B, 8), 64)
    B_pad = _round_up(B, Bt)

    param_f = jnp.asarray(param, jnp.float32)
    if B_pad != B:
        param_f = jnp.pad(param_f, ((0, B_pad - B), (0, 0)))   # zero rows -> zero output

    # Rough VMEM footprint (resident constants + double-buffered in/out); only
    # raise the scoped limit when it actually matters (v5e default is 16 MiB).
    vmem_bytes = 4 * (2 * n_cards * F + 2 * F + 2 * Bt * F + 2 * Bt * feat)
    compiler_kwargs = dict(dimension_semantics=("parallel",))
    if 2 * vmem_bytes > 16 * 1024 * 1024:
        compiler_kwargs["vmem_limit_bytes"] = min(2 * vmem_bytes + (1 << 20),
                                                  100 * 1024 * 1024)

    out_flat = pl.pallas_call(
        _one_card_poker_kernel,
        out_shape=jax.ShapeDtypeStruct((B_pad, F), jnp.float32),
        grid_spec=pltpu.PrefetchScalarGridSpec(
            num_scalar_prefetch=0,
            grid=(B_pad // Bt,),
            in_specs=[
                pl.BlockSpec((Bt, feat), lambda b: (b, 0)),
                # Constants: same block every step -> fetched once, stay resident.
                pl.BlockSpec((n_cards, F), lambda b: (0, 0)),
                pl.BlockSpec((n_cards, F), lambda b: (0, 0)),
                pl.BlockSpec((2, F), lambda b: (0, 0)),
            ],
            out_specs=pl.BlockSpec((Bt, F), lambda b: (b, 0)),
        ),
        compiler_params=pltpu.CompilerParams(**compiler_kwargs),
    )(param_f, jnp.asarray(SelR), jnp.asarray(SelC), jnp.asarray(KAB))

    return out_flat[:B].reshape(B, four_n, four_n)


def _reference(param, n):
    """NumPy float64 re-implementation of the PyTorch forward pass."""
    param = np.asarray(param, np.float64)
    B = param.shape[0]
    cmpmat = np.zeros((n, n))
    cmpmat[np.triu_indices(n)] += 1.0
    cmpmat[np.tril_indices(n)] -= 1.0
    P = np.zeros((B, 4 * n, 4 * n))
    for b in range(B):
        initial = param[b, 0]
        raiseval = param[b, 1]
        tr = initial + raiseval
        c = param[b, 2:]
        outer = np.outer(c, c)
        corr = np.diag(c) ** 2
        norm = np.diag(1.0 / (1.0 - c))
        pm = norm @ (outer - corr)
        P[b, 0:2 * n:2, 0:2 * n:2] = cmpmat * pm * initial
        P[b, 2 * n:4 * n:2, 1:2 * n:2] = pm * initial
        P[b, 1:2 * n:2, 2 * n:4 * n:2] = -pm * initial
        P[b, 2 * n + 1:4 * n:2, 1:2 * n:2] = cmpmat * pm * tr
        P[b, 1:2 * n:2, 2 * n + 1:4 * n:2] = cmpmat * pm * tr
    return P


if __name__ == "__main__":
    B, nCards = 2, 4
    key = jax.random.PRNGKey(0)
    k1, k2, k3 = jax.random.split(key, 3)
    initial = jax.random.uniform(k1, (B, 1), minval=0.5, maxval=1.5)
    raiseval = jax.random.uniform(k2, (B, 1), minval=0.5, maxval=1.5)
    carddist = jax.nn.softmax(jax.random.normal(k3, (B, nCards)), axis=-1)
    param = jnp.concatenate([initial, raiseval, carddist], axis=1).astype(jnp.float32)

    P = one_card_poker_wnhd(param, nCards)
    P = jax.block_until_ready(P)

    P_ref = _reference(np.asarray(param), nCards)
    np.testing.assert_allclose(np.asarray(P), P_ref, rtol=1e-4, atol=1e-5)
    print("KERNEL_OK")
</pallas_src>

<mosaic_0001>
module attributes {stable_mosaic.version = 11 : i64} {
  func.func @_one_card_poker_kernel(%arg0: i32, %arg1: memref<8x6xf32, #tpu.memory_space<vmem>>, %arg2: memref<4x256xf32, #tpu.memory_space<vmem>>, %arg3: memref<4x256xf32, #tpu.memory_space<vmem>>, %arg4: memref<2x256xf32, #tpu.memory_space<vmem>>, %arg5: memref<8x256xf32, #tpu.memory_space<vmem>>) attributes {dimension_semantics = [#tpu.dimension_semantics<parallel>], iteration_bounds = array<i64: 1>, scalar_prefetch = 0 : i64, scratch_operands = 0 : i64, tpu.core_type = #tpu.core_type<tc>, window_params = [{transform_indices = @transform_0, window_bounds = array<i64: 8, 6>}, {pipeline_mode = #tpu.pipeline_mode<synchronous>, transform_indices = @transform_1, window_bounds = array<i64: 4, 256>}, {pipeline_mode = #tpu.pipeline_mode<synchronous>, transform_indices = @transform_2, window_bounds = array<i64: 4, 256>}, {pipeline_mode = #tpu.pipeline_mode<synchronous>, transform_indices = @transform_3, window_bounds = array<i64: 2, 256>}, {transform_indices = @transform_4, window_bounds = array<i64: 8, 256>}]} {
    %c0 = arith.constant 0 : index
    %c2 = arith.constant 2 : index
    %0 = vector.load %arg1[%c0, %c2] : memref<8x6xf32, #tpu.memory_space<vmem>>, vector<8x4xf32>
    %cst = arith.constant 1.000000e+00 : f32
    %1 = vector.broadcast %cst : f32 to vector<8x4xf32>
    %2 = arith.subf %1, %0 : vector<8x4xf32>
    %3 = arith.divf %0, %2 : vector<8x4xf32>
    %c0_0 = arith.constant 0 : index
    %c0_1 = arith.constant 0 : index
    %4 = vector.load %arg2[%c0_0, %c0_1] : memref<4x256xf32, #tpu.memory_space<vmem>>, vector<4x256xf32>
    %cst_2 = arith.constant dense<0.000000e+00> : vector<8x256xf32>
    %5 = tpu.matmul %3, %4, %cst_2 {dimension_numbers = #tpu.dot_dimension_numbers<[1], [0], [0], [1], [0, 0, 1, 1], [], []>} : vector<8x4xf32>, vector<4x256xf32>, vector<8x256xf32> -> vector<8x256xf32>
    %c0_3 = arith.constant 0 : index
    %c0_4 = arith.constant 0 : index
    %6 = vector.load %arg3[%c0_3, %c0_4] : memref<4x256xf32, #tpu.memory_space<vmem>>, vector<4x256xf32>
    %cst_5 = arith.constant dense<0.000000e+00> : vector<8x256xf32>
    %7 = tpu.matmul %0, %6, %cst_5 {dimension_numbers = #tpu.dot_dimension_numbers<[1], [0], [0], [1], [0, 0, 1, 1], [], []>} : vector<8x4xf32>, vector<4x256xf32>, vector<8x256xf32> -> vector<8x256xf32>
    %c0_6 = arith.constant 0 : index
    %c0_7 = arith.constant 0 : index
    %8 = vector.load %arg1[%c0_6, %c0_7] : memref<8x6xf32, #tpu.memory_space<vmem>>, vector<8x2xf32>
    %c0_8 = arith.constant 0 : index
    %c0_9 = arith.constant 0 : index
    %9 = vector.load %arg4[%c0_8, %c0_9] : memref<2x256xf32, #tpu.memory_space<vmem>>, vector<2x256xf32>
    %cst_10 = arith.constant dense<0.000000e+00> : vector<8x256xf32>
    %10 = tpu.matmul %8, %9, %cst_10 {dimension_numbers = #tpu.dot_dimension_numbers<[1], [0], [0], [1], [0, 0, 1, 1], [], []>} : vector<8x2xf32>, vector<2x256xf32>, vector<8x256xf32> -> vector<8x256xf32>
    %11 = arith.mulf %5, %7 : vector<8x256xf32>
    %12 = arith.mulf %11, %10 : vector<8x256xf32>
    %c0_11 = arith.constant 0 : index
    %c0_12 = arith.constant 0 : index
    %13 = vector.load %arg5[%c0_11, %c0_12] : memref<8x256xf32, #tpu.memory_space<vmem>>, vector<8x256xf32>
    tpu.vector_store %arg5[%c0_11, %c0_12], %12 {strides = array<i32>} : memref<8x256xf32, #tpu.memory_space<vmem>>, vector<8x256xf32>,
    return
  }
  func.func @transform_0(%arg0: i32) -> (i32, i32) {
    %c0_i32 = arith.constant 0 : i32
    %c0_i32_0 = arith.constant 0 : i32
    return %arg0, %c0_i32 : i32, i32
  }
  func.func @transform_1(%arg0: i32) -> (i32, i32) {
    %c0_i32 = arith.constant 0 : i32
    %c0_i32_0 = arith.constant 0 : i32
    %c0_i32_1 = arith.constant 0 : i32
    return %c0_i32, %c0_i32_0 : i32, i32
  }
  func.func @transform_2(%arg0: i32) -> (i32, i32) {
    %c0_i32 = arith.constant 0 : i32
    %c0_i32_0 = arith.constant 0 : i32
    %c0_i32_1 = arith.constant 0 : i32
    return %c0_i32, %c0_i32_0 : i32, i32
  }
  func.func @transform_3(%arg0: i32) -> (i32, i32) {
    %c0_i32 = arith.constant 0 : i32
    %c0_i32_0 = arith.constant 0 : i32
    %c0_i32_1 = arith.constant 0 : i32
    return %c0_i32, %c0_i32_0 : i32, i32
  }
  func.func @transform_4(%arg0: i32) -> (i32, i32) {
    %c0_i32 = arith.constant 0 : i32
    %c0_i32_0 = arith.constant 0 : i32
    return %arg0, %c0_i32 : i32, i32
  }
}

</mosaic_0001>

<llo_original>
// kernel: tpu_custom_call.1
$region0: #{tpu_custom_call.1}
  #allocation0 [shape = 'u32[]', space=smem, size = 0x4, offset = 0x4, fixed_abs, tag = 'smem constant byte address 0x4 - core index']
  #allocation1 [shape = 'u32[144,128]{1,0:T(1,128)}', space=vmem, size = 0x12000, scoped, tag = 'internal scratch']
  %s0 = inlined_call_operand.hbm [shape: f32[8,6], index: 0, kind: input, shape index: {}]
  %s1 = inlined_call_operand.hbm [shape: f32[4,256], index: 1, kind: input, shape index: {}]
  %s2 = inlined_call_operand.hbm [shape: f32[4,256], index: 2, kind: input, shape index: {}]
  %s3 = inlined_call_operand.vmem [shape: f32[2,256], index: 3, kind: input, shape index: {}]
  %s4 = inlined_call_operand.hbm [shape: f32[8,256], index: 4, kind: output, shape index: {}]
  %s5 = sld [smem:[#allocation0]]
  $region38: #{tpu_custom_call.1} parent=0
    _
  %s7 = ssub.s32 1, %s5
  %s8 = scalar_select 0, %s7, %s5
  $region1: #{tpu_custom_call.1} parent=0
    #allocation2 [shape = 'u8[4096]{0}', space=vmem, size = 0x1000, scoped, tag = 'input window, operand 0, single buffered']
    #allocation3 [shape = 's32[1]{0}', space=sflag, size = 0x4, scoped, tag = 'scoped memory for tpu_custom_call.1']
    #allocation4 [shape = 's32[1]{0}', space=sflag, size = 0x4, scoped, tag = 'scoped memory for tpu_custom_call.1']
    #allocation5 [shape = 'u8[4096]{0}', space=vmem, size = 0x1000, scoped, tag = 'input window, operand 1, single buffered']
    #allocation6 [shape = 's32[1]{0}', space=sflag, size = 0x4, scoped, tag = 'scoped memory for tpu_custom_call.1']
    #allocation7 [shape = 'u8[4096]{0}', space=vmem, size = 0x1000, scoped, tag = 'input window, operand 2, single buffered']
    #allocation8 [shape = 'u8[8192]{0}', space=vmem, size = 0x2000, scoped, tag = 'output window, operand 0, single buffered']
    %9 = vsyncpa [#allocation3], 0
    %10 = vsyncpa [#allocation6], 0
    %11 = vsyncpa [#allocation4], 0
    // Predicated region
    $region2: #{tpu_custom_call.1} parent=1 // pred_check
      _
    $region3: #{tpu_custom_call.1} parent=1 // pred_check_branch
      %13 = sbr.rel (0) target = $region5
    $region4: #{tpu_custom_call.1} parent=1 // pred_region
      %s15 = ssub.s32 128, 128
      %16 = vsyncadd [#allocation3], %s15
      %s18 = sshll.u32 [#allocation2], 4
      %s19 = int_to_ptr.vmem [resolvable:$true] %s18
      %21 = dma.hbm_to_vmem [thread:$0]  %s0, 128, %s19, [#allocation3]
    $region5: #{tpu_custom_call.1} parent=1 // pred_fallthru
      _
    // Predicated region
    $region6: #{tpu_custom_call.1} parent=1 // pred_check
      _
    $region7: #{tpu_custom_call.1} parent=1 // pred_check_branch
      %23 = sbr.rel (0) target = $region9
    $region8: #{tpu_custom_call.1} parent=1 // pred_region
      %s25 = ssub.s32 128, 128
      %26 = vsyncadd [#allocation6], %s25
      %s28 = sshll.u32 [#allocation5], 4
      %s29 = int_to_ptr.vmem [resolvable:$true] %s28
      %31 = dma.hbm_to_vmem [thread:$0]  %s1, 128, %s29, [#allocation6]
    $region9: #{tpu_custom_call.1} parent=1 // pred_fallthru
      _
    // Predicated region
    $region10: #{tpu_custom_call.1} parent=1 // pred_check
      _
    $region11: #{tpu_custom_call.1} parent=1 // pred_check_branch
      %33 = sbr.rel (0) target = $region13
    $region12: #{tpu_custom_call.1} parent=1 // pred_region
      %s35 = ssub.s32 128, 128
      %36 = vsyncadd [#allocation6], %s35
      %s38 = sshll.u32 [#allocation7], 4
      %s39 = int_to_ptr.vmem [resolvable:$true] %s38
      %41 = dma.hbm_to_vmem [thread:$0]  %s2, 128, %s39, [#allocation6]
    $region13: #{tpu_custom_call.1} parent=1 // pred_fallthru
      _
    // Predicated region
    $region14: #{tpu_custom_call.1} parent=1 // pred_check
      _
    $region15: #{tpu_custom_call.1} parent=1 // pred_check_branch
      %43 = sbr.rel (0) target = $region17
    $region16: #{tpu_custom_call.1} parent=1 // pred_region
      _
    $region17: #{tpu_custom_call.1} parent=1 // pred_fallthru
      _
    // Predicated region
    $region18: #{tpu_custom_call.1} parent=1 // pred_check
      _
    $region19: #{tpu_custom_call.1} parent=1 // pred_check_branch
      %45 = sbr.rel (0) target = $region21
    $region20: #{tpu_custom_call.1} parent=1 // pred_region
      %46 = dma.done [#allocation3], 128
    $region21: #{tpu_custom_call.1} parent=1 // pred_fallthru
      _
    // Predicated region
    $region22: #{tpu_custom_call.1} parent=1 // pred_check
      _
    $region23: #{tpu_custom_call.1} parent=1 // pred_check_branch
      %48 = sbr.rel (0) target = $region25
    $region24: #{tpu_custom_call.1} parent=1 // pred_region
      %49 = dma.done [#allocation6], 128
    $region25: #{tpu_custom_call.1} parent=1 // pred_fallthru
      _
    // Predicated region
    $region26: #{tpu_custom_call.1} parent=1 // pred_check
      _
    $region27: #{tpu_custom_call.1} parent=1 // pred_check_branch
      %51 = sbr.rel (0) target = $region29
    $region28: #{tpu_custom_call.1} parent=1 // pred_region
      %52 = dma.done [#allocation6], 128
    $region29: #{tpu_custom_call.1} parent=1 // pred_fallthru
      _
    %v53 = vld [vmem:[#allocation2] sm:$0xff]
    %v54 = vsub.f32 1.0, %v53
    %v55 = vrcp.pop %v54
    %v56 = vmul.f32 %v53, %v55
    %v57 = vld [vmem:[#allocation5] sm:$0xff]
    %59 = vrot.lane.b32.xlu0 %v56, 126
    %v60 = vpop.permute.xlu0 %59
    %v62 = vcombine.high %v57, %v57
    %vm63 = vcmask 31744
    %v64 = vsel %vm63, %v60, 0
    %vm66 = vcmask 1043456
    %v67 = vsel %vm66, %v57, 0
    %v69 = vsel %vm66, %v62, 0
    %71 = vmatprep.subr.mxu0 %v69
    %72 = vmatpush1.msra.mxu0 %v67
    %73 = vmatprep.subr.mxu0 0.0
    %74 = vmatpush1.msra.mxu0 0.0
    %75 = vmatprep.subr.mxu0 0.0
    %76 = vmatpush1.msra.mxu0 0.0
    %77 = vmatprep.subr.mxu0 0.0
    %78 = vmatpush1.msra.mxu0 0.0
    %79 = vmatprep.subr.mxu0 0.0
    %80 = vmatpush1.msra.mxu0 0.0
    %81 = vmatprep.subr.mxu0 0.0
    %82 = vmatpush1.msra.mxu0 0.0
    %83 = vmatprep.subr.mxu0 0.0
    %84 = vmatpush1.msra.mxu0 0.0
    %85 = vmatprep.subr.mxu0 0.0
    %86 = vmatpush1.msra.mxu0 0.0
    %87 = vmatprep.subr.mxu0 0.0
    %88 = vmatpush1.msra.mxu0 0.0
    %89 = vmatprep.subr.mxu0 0.0
    %90 = vmatpush1.msra.mxu0 0.0
    %91 = vmatprep.subr.mxu0 0.0
    %92 = vmatpush1.msra.mxu0 0.0
    %93 = vmatprep.subr.mxu0 0.0
    %94 = vmatpush1.msra.mxu0 0.0
    %95 = vmatprep.subr.mxu0 0.0
    %96 = vmatpush1.msra.mxu0 0.0
    %97 = vmatprep.subr.mxu0 0.0
    %98 = vmatpush1.msra.mxu0 0.0
    %99 = vmatprep.subr.mxu0 0.0
    %100 = vmatpush1.msra.mxu0 0.0
    %101 = vmatprep.subr.mxu0 0.0
    %102 = vmatpush1.msra.mxu0 0.0
    %103 = vmatprep.subr.mxu0 0.0
    %104 = vmatpush1.msra.mxu0 0.0
    %105 = vmatprep.subr.mxu0 0.0
    %106 = vmatpush1.msra.mxu0 0.0
    %107 = vmatprep.subr.mxu0 0.0
    %108 = vmatpush1.msra.mxu0 0.0
    %109 = vmatprep.subr.mxu0 0.0
    %110 = vmatpush1.msra.mxu0 0.0
    %111 = vmatprep.subr.mxu0 0.0
    %112 = vmatpush1.msra.mxu0 0.0
    %113 = vmatprep.subr.mxu0 0.0
    %114 = vmatpush1.msra.mxu0 0.0
    %115 = vmatprep.subr.mxu0 0.0
    %116 = vmatpush1.msra.mxu0 0.0
    %117 = vmatprep.subr.mxu0 0.0
    %118 = vmatpush1.msra.mxu0 0.0
    %119 = vmatprep.subr.mxu0 0.0
    %120 = vmatpush1.msra.mxu0 0.0
    %121 = vmatprep.subr.mxu0 0.0
    %122 = vmatpush1.msra.mxu0 0.0
    %123 = vmatprep.subr.mxu0 0.0
    %124 = vmatpush1.msra.mxu0 0.0
    %125 = vmatprep.subr.mxu0 0.0
    %126 = vmatpush1.msra.mxu0 0.0
    %127 = vmatprep.subr.mxu0 0.0
    %128 = vmatpush1.msra.mxu0 0.0
    %129 = vmatprep.subr.mxu0 0.0
    %130 = vmatpush1.msra.mxu0 0.0
    %131 = vmatprep.subr.mxu0 0.0
    %132 = vmatpush1.msra.mxu0 0.0
    %133 = vmatprep.subr.mxu0 0.0
    %134 = vmatpush1.msra.mxu0 0.0
    %135 = vmatprep.mubr.f32.mxu0 0.0
    %136 = vmatmul.mubr.f32.gmra.mrb[0].mxu0 %v64
    %v137 = vpop.f32.mrb[0].mxu0
    %v138 = vadd.f32 0.0, %v137
    %v139 = vpop.f32.mrb[0].mxu0
    %v140 = vadd.f32 0.0, %v139
    %141 = vdwg.mxu0
    %v142 = vld [vmem:[#allocation7] sm:$0xff]
    %144 = vrot.lane.b32.xlu0 %v53, 126
    %v145 = vpop.permute.xlu0 %144
    %v147 = vcombine.high %v142, %v142
    %v148 = vsel %vm63, %v145, 0
    %v150 = vsel %vm66, %v142, 0
    %v152 = vsel %vm66, %v147, 0
    %154 = vmatprep.subr.mxu0 %v152
    %155 = vmatpush1.msra.mxu0 %v150
    %156 = vmatprep.subr.mxu0 0.0
    %157 = vmatpush1.msra.mxu0 0.0
    %158 = vmatprep.subr.mxu0 0.0
    %159 = vmatpush1.msra.mxu0 0.0
    %160 = vmatprep.subr.mxu0 0.0
    %161 = vmatpush1.msra.mxu0 0.0
    %162 = vmatprep.subr.mxu0 0.0
    %163 = vmatpush1.msra.mxu0 0.0
    %164 = vmatprep.subr.mxu0 0.0
    %165 = vmatpush1.msra.mxu0 0.0
    %166 = vmatprep.subr.mxu0 0.0
    %167 = vmatpush1.msra.mxu0 0.0
    %168 = vmatprep.subr.mxu0 0.0
    %169 = vmatpush1.msra.mxu0 0.0
    %170 = vmatprep.subr.mxu0 0.0
    %171 = vmatpush1.msra.mxu0 0.0
    %172 = vmatprep.subr.mxu0 0.0
    %173 = vmatpush1.msra.mxu0 0.0
    %174 = vmatprep.subr.mxu0 0.0
    %175 = vmatpush1.msra.mxu0 0.0
    %176 = vmatprep.subr.mxu0 0.0
    %177 = vmatpush1.msra.mxu0 0.0
    %178 = vmatprep.subr.mxu0 0.0
    %179 = vmatpush1.msra.mxu0 0.0
    %180 = vmatprep.subr.mxu0 0.0
    %181 = vmatpush1.msra.mxu0 0.0
    %182 = vmatprep.subr.mxu0 0.0
    %183 = vmatpush1.msra.mxu0 0.0
    %184 = vmatprep.subr.mxu0 0.0
    %185 = vmatpush1.msra.mxu0 0.0
    %186 = vmatprep.subr.mxu0 0.0
    %187 = vmatpush1.msra.mxu0 0.0
    %188 = vmatprep.subr.mxu0 0.0
    %189 = vmatpush1.msra.mxu0 0.0
    %190 = vmatprep.subr.mxu0 0.0
    %191 = vmatpush1.msra.mxu0 0.0
    %192 = vmatprep.subr.mxu0 0.0
    %193 = vmatpush1.msra.mxu0 0.0
    %194 = vmatprep.subr.mxu0 0.0
    %195 = vmatpush1.msra.mxu0 0.0
    %196 = vmatprep.subr.mxu0 0.0
    %197 = vmatpush1.msra.mxu0 0.0
    %198 = vmatprep.subr.mxu0 0.0
    %199 = vmatpush1.msra.mxu0 0.0
    %200 = vmatprep.subr.mxu0 0.0
    %201 = vmatpush1.msra.mxu0 0.0
    %202 = vmatprep.subr.mxu0 0.0
    %203 = vmatpush1.msra.mxu0 0.0
    %204 = vmatprep.subr.mxu0 0.0
    %205 = vmatpush1.msra.mxu0 0.0
    %206 = vmatprep.subr.mxu0 0.0
    %207 = vmatpush1.msra.mxu0 0.0
    %208 = vmatprep.subr.mxu0 0.0
    %209 = vmatpush1.msra.mxu0 0.0
    %210 = vmatprep.subr.mxu0 0.0
    %211 = vmatpush1.msra.mxu0 0.0
    %212 = vmatprep.subr.mxu0 0.0
    %213 = vmatpush1.msra.mxu0 0.0
    %214 = vmatprep.subr.mxu0 0.0
    %215 = vmatpush1.msra.mxu0 0.0
    %216 = vmatprep.subr.mxu0 0.0
    %217 = vmatpush1.msra.mxu0 0.0
    %218 = vmatprep.mubr.f32.mxu0 0.0
    %219 = vmatmul.mubr.f32.gmra.mrb[0].mxu0 %v148
    %v220 = vpop.f32.mrb[0].mxu0
    %v221 = vadd.f32 0.0, %v220
    %v222 = vpop.f32.mrb[0].mxu0
    %v223 = vadd.f32 0.0, %v222
    %224 = vdwg.mxu0
    %v225 = vld [vmem:[#allocation2] sm:$0xff]
    %v226 = vld [vmem:[%s3] sm:$0xf]
    %v229 = vunpack.c.l.s4 1983009808
    %v230 = vunpack.c.0.s8 %v229
    %v231 = vlaneseq
    %v232 = vshrl.u32 %v231, 7
    %v233 = vsub.s32 %v230, %v232
    %v234 = vrot.slane %v226, %v233
    %v235 = vcombine.high %v234, %v234
    %vm236 = vcmask 15360
    %v238 = vsel %vm236, %v225, 0
    %vm240 = vcmask 1041408
    %v241 = vsel %vm240, %v234, 0
    %v243 = vsel %vm240, %v235, 0
    %245 = vmatprep.subr.mxu0 %v243
    %246 = vmatpush1.msra.mxu0 %v241
    %247 = vmatprep.subr.mxu0 0.0
    %248 = vmatpush1.msra.mxu0 0.0
    %249 = vmatprep.subr.mxu0 0.0
    %250 = vmatpush1.msra.mxu0 0.0
    %251 = vmatprep.subr.mxu0 0.0
    %252 = vmatpush1.msra.mxu0 0.0
    %253 = vmatprep.subr.mxu0 0.0
    %254 = vmatpush1.msra.mxu0 0.0
    %255 = vmatprep.subr.mxu0 0.0
    %256 = vmatpush1.msra.mxu0 0.0
    %257 = vmatprep.subr.mxu0 0.0
    %258 = vmatpush1.msra.mxu0 0.0
    %259 = vmatprep.subr.mxu0 0.0
    %260 = vmatpush1.msra.mxu0 0.0
    %261 = vmatprep.subr.mxu0 0.0
    %262 = vmatpush1.msra.mxu0 0.0
    %263 = vmatprep.subr.mxu0 0.0
    %264 = vmatpush1.msra.mxu0 0.0
    %265 = vmatprep.subr.mxu0 0.0
    %266 = vmatpush1.msra.mxu0 0.0
    %267 = vmatprep.subr.mxu0 0.0
    %268 = vmatpush1.msra.mxu0 0.0
    %269 = vmatprep.subr.mxu0 0.0
    %270 = vmatpush1.msra.mxu0 0.0
    %271 = vmatprep.subr.mxu0 0.0
    %272 = vmatpush1.msra.mxu0 0.0
    %273 = vmatprep.subr.mxu0 0.0
    %274 = vmatpush1.msra.mxu0 0.0
    %275 = vmatprep.subr.mxu0 0.0
    %276 = vmatpush1.msra.mxu0 0.0
    %277 = vmatprep.subr.mxu0 0.0
    %278 = vmatpush1.msra.mxu0 0.0
    %279 = vmatprep.subr.mxu0 0.0
    %280 = vmatpush1.msra.mxu0 0.0
    %281 = vmatprep.subr.mxu0 0.0
    %282 = vmatpush1.msra.mxu0 0.0
    %283 = vmatprep.subr.mxu0 0.0
    %284 = vmatpush1.msra.mxu0 0.0
    %285 = vmatprep.subr.mxu0 0.0
    %286 = vmatpush1.msra.mxu0 0.0
    %287 = vmatprep.subr.mxu0 0.0
    %288 = vmatpush1.msra.mxu0 0.0
    %289 = vmatprep.subr.mxu0 0.0
    %290 = vmatpush1.msra.mxu0 0.0
    %291 = vmatprep.subr.mxu0 0.0
    %292 = vmatpush1.msra.mxu0 0.0
    %293 = vmatprep.subr.mxu0 0.0
    %294 = vmatpush1.msra.mxu0 0.0
    %295 = vmatprep.subr.mxu0 0.0
    %296 = vmatpush1.msra.mxu0 0.0
    %297 = vmatprep.subr.mxu0 0.0
    %298 = vmatpush1.msra.mxu0 0.0
    %299 = vmatprep.subr.mxu0 0.0
    %300 = vmatpush1.msra.mxu0 0.0
    %301 = vmatprep.subr.mxu0 0.0
    %302 = vmatpush1.msra.mxu0 0.0
    %303 = vmatprep.subr.mxu0 0.0
    %304 = vmatpush1.msra.mxu0 0.0
    %305 = vmatprep.subr.mxu0 0.0
    %306 = vmatpush1.msra.mxu0 0.0
    %307 = vmatprep.subr.mxu0 0.0
    %308 = vmatpush1.msra.mxu0 0.0
    %309 = vmatprep.mubr.f32.mxu0 0.0
    %310 = vmatmul.mubr.f32.gmra.mrb[0].mxu0 %v238
    %v311 = vpop.f32.mrb[0].mxu0
    %v312 = vadd.f32 0.0, %v311
    %v313 = vpop.f32.mrb[0].mxu0
    %v314 = vadd.f32 0.0, %v313
    %315 = vdwg.mxu0
    %v316 = vmul.f32 %v138, %v221
    %v317 = vmul.f32 %v140, %v223
    %v318 = vmul.f32 %v316, %v312
    %v319 = vmul.f32 %v317, %v314
    %320 = vst [vmem:[#allocation8] sm:$0xff] %v318
    %321 = vst [vmem:[#allocation8 + $0x8] sm:$0xff] %v319
    // Predicated region
    $region30: #{tpu_custom_call.1} parent=1 // pred_check
      _
    $region31: #{tpu_custom_call.1} parent=1 // pred_check_branch
      %323 = sbr.rel (0) target = $region33
    $region32: #{tpu_custom_call.1} parent=1 // pred_region
      %s325 = ssub.s32 256, 256
      %326 = vsyncadd [#allocation4], %s325
      %s328 = sshll.u32 [#allocation8], 4
      %s329 = int_to_ptr.vmem [resolvable:$true] %s328
      %331 = dma.vmem_to_hbm [thread:$0]  %s329, 256, %s4, [#allocation4]
    $region33: #{tpu_custom_call.1} parent=1 // pred_fallthru
      _
    // Predicated region
    $region34: #{tpu_custom_call.1} parent=1 // pred_check
      _
    $region35: #{tpu_custom_call.1} parent=1 // pred_check_branch
      %333 = sbr.rel (0) target = $region37
    $region36: #{tpu_custom_call.1} parent=1 // pred_region
      %334 = dma.done [#allocation4], 256
    $region37: #{tpu_custom_call.1} parent=1 // pred_fallthru
      _
    %335 = vsyncpa [#allocation3], 1
    %336 = vsyncpa [#allocation6], 1
    %337 = vsyncpa [#allocation4], 1

</llo_original>
